<compile_context>
chip_gen: v6e
topology: v6e:2x2x1
jax: 0.10.0
libtpu: 0.0.40
codegen_flags: <defaults>
</compile_context>

<pallas_src>
import jax
import jax.numpy as jnp
from jax.experimental import pallas as pl
from jax.experimental.pallas import tpu as pltpu


def _softplus(x):
    # Numerically stable softplus using only elementwise VPU/EUP ops.
    return jnp.maximum(x, 0.0) + jnp.log(1.0 + jnp.exp(-jnp.abs(x)))


def ppo_actor_kernel(s_ref, w1_ref, b1_ref, w2_ref, b2_ref, wh_ref, bh_ref,
                     out_ref):
    # State arrives as f32 (single HBM read); cast to bf16 just before the MXU.
    x = s_ref[...].astype(jnp.bfloat16)                               # [TB, S]

    h = jnp.dot(x, w1_ref[...], preferred_element_type=jnp.float32) + b1_ref[...]
    h = jnp.tanh(h)                                                   # f32 [TB, H]

    h = jnp.dot(h.astype(jnp.bfloat16), w2_ref[...],
                preferred_element_type=jnp.float32) + b2_ref[...]
    h = jnp.tanh(h)                                                   # f32 [TB, H]

    # alpha_head and beta_head fused into a single [H, 2A] matmul.
    z = jnp.dot(h.astype(jnp.bfloat16), wh_ref[...],
                preferred_element_type=jnp.float32) + bh_ref[...]     # f32 [TB, 2A]
    out_ref[...] = (_softplus(z) + 1.0).astype(out_ref.dtype)


def _pick_tile(B, block_batch):
    """Batch tile: full batch when tiny; otherwise a multiple-of-8 tile capped
    so the grid has >= 2 steps (v7x has 2 TensorCores; a 1-step grid leaves one
    idle). On single-TC v5e/v6e the extra step costs ~0.35 us — negligible."""
    if B <= 16:
        return B
    half = ((B // 2) + 7) // 8 * 8
    return max(8, min(block_batch, half))


def ppo_actor_forward(state, params, *, block_batch=1024):
    """state: [B, state_size] f32 (cast to bf16 inside the kernel).
    params: w1 [S,H] bf16, b1 [1,H] f32, w2 [H,H] bf16, b2 [1,H] f32,
            wh [H,2A] bf16 (alpha|beta heads fused), bh [1,2A] f32.
    Returns the fused [B, 2A] f32 array: columns [:A] = alpha, [A:] = beta."""
    B, S = state.shape
    H = params["w1"].shape[1]
    A2 = params["wh"].shape[1]

    TB = _pick_tile(B, block_batch)
    grid = (pl.cdiv(B, TB),)

    # Weights are ~KiB and VMEM-resident; per-step traffic is just the state
    # tile + output tile, far under any VMEM limit (64 MiB on v7x included).
    cost = pl.CostEstimate(
        flops=2 * B * (S * H + H * H + H * A2),
        transcendentals=B * (2 * H + 2 * A2),
        bytes_accessed=int(state.size * 4 + B * A2 * 4 +
                           sum(int(p.size) * p.dtype.itemsize
                               for p in params.values())),
    )

    return pl.pallas_call(
        ppo_actor_kernel,
        out_shape=jax.ShapeDtypeStruct((B, A2), jnp.float32),
        grid=grid,
        in_specs=[
            pl.BlockSpec((TB, S), lambda i: (i, 0)),     # state tile (pipelined)
            pl.BlockSpec((S, H), lambda i: (0, 0)),      # w1  (VMEM-resident)
            pl.BlockSpec((1, H), lambda i: (0, 0)),      # b1
            pl.BlockSpec((H, H), lambda i: (0, 0)),      # w2
            pl.BlockSpec((1, H), lambda i: (0, 0)),      # b2
            pl.BlockSpec((H, A2), lambda i: (0, 0)),     # fused heads weight
            pl.BlockSpec((1, A2), lambda i: (0, 0)),     # fused heads bias
        ],
        out_specs=pl.BlockSpec((TB, A2), lambda i: (i, 0)),
        compiler_params=pltpu.CompilerParams(
            dimension_semantics=("parallel",)),
        cost_estimate=cost,
    )(state, params["w1"], params["b1"], params["w2"], params["b2"],
      params["wh"], params["bh"])


# ----------------------------------------------------------------------------
# Parameter construction (mimics PyTorch nn.Linear default init, uniform
# +/- 1/sqrt(fan_in)), stored as [in, out] weights / [1, out] biases.
# Hidden width is zero-padded to a multiple of 128 lanes (exact zeros, so the
# forward is mathematically unchanged: tanh(0)=0 and zero rows contribute 0).
# ----------------------------------------------------------------------------
def _init_linear(key, fan_in, fan_out):
    kw, kb = jax.random.split(key)
    bound = 1.0 / jnp.sqrt(jnp.float32(fan_in))
    w = jax.random.uniform(kw, (fan_in, fan_out), jnp.float32, -bound, bound)
    b = jax.random.uniform(kb, (1, fan_out), jnp.float32, -bound, bound)
    return w, b


def make_params(key, state_size, action_size, neu_size, *, lane_pad=True):
    k1, k2, ka, kb = jax.random.split(key, 4)
    w1, b1 = _init_linear(k1, state_size, neu_size)
    w2, b2 = _init_linear(k2, neu_size, neu_size)
    wa, ba = _init_linear(ka, neu_size, action_size)   # alpha_head
    wb, bb = _init_linear(kb, neu_size, action_size)   # beta_head

    wh = jnp.concatenate([wa, wb], axis=1)             # fuse alpha|beta heads
    bh = jnp.concatenate([ba, bb], axis=1)

    if lane_pad:
        Hp = max(128, -(-neu_size // 128) * 128)       # round up to 128 lanes
        pad = Hp - neu_size
        if pad:
            w1 = jnp.pad(w1, ((0, 0), (0, pad)))
            b1 = jnp.pad(b1, ((0, 0), (0, pad)))
            w2 = jnp.pad(w2, ((0, pad), (0, pad)))
            b2 = jnp.pad(b2, ((0, 0), (0, pad)))
            wh = jnp.pad(wh, ((0, pad), (0, 0)))

    return {
        "w1": w1.astype(jnp.bfloat16), "b1": b1,
        "w2": w2.astype(jnp.bfloat16), "b2": b2,
        "wh": wh.astype(jnp.bfloat16), "bh": bh,
    }


def reference_forward(state, p):
    """Pure-JAX reference using the same bf16 weights / f32 accumulation."""
    x = state.astype(jnp.bfloat16)
    h = jnp.tanh(jnp.dot(x, p["w1"], preferred_element_type=jnp.float32) + p["b1"])
    h = jnp.tanh(jnp.dot(h.astype(jnp.bfloat16), p["w2"],
                         preferred_element_type=jnp.float32) + p["b2"])
    z = jnp.dot(h.astype(jnp.bfloat16), p["wh"],
                preferred_element_type=jnp.float32) + p["bh"]
    ab = _softplus(z) + 1.0
    A = p["wh"].shape[1] // 2
    return ab[:, :A], ab[:, A:]


if __name__ == "__main__":
    state_size, action_size, neu_size = 8, 4, 32

    key = jax.random.PRNGKey(0)
    k_state, k_state2, k_params = jax.random.split(key, 3)
    params = make_params(k_params, state_size, action_size, neu_size)

    # --- small batch: single tile, single grid step --------------------------
    state = jax.random.normal(k_state, (8, state_size), jnp.float32)
    out = ppo_actor_forward(state, params)
    jax.block_until_ready(out)
    alpha, beta = out[:, :action_size], out[:, action_size:]

    ra, rb = reference_forward(state, params)
    assert alpha.shape == (8, action_size) and beta.shape == (8, action_size)
    assert bool(jnp.all(alpha > 1.0)) and bool(jnp.all(beta > 1.0))
    assert jnp.allclose(alpha, ra, atol=1e-3, rtol=1e-3), "alpha mismatch"
    assert jnp.allclose(beta, rb, atol=1e-3, rtol=1e-3), "beta mismatch"

    # --- ragged multi-step grid (B % TB != 0): partial last output tile ------
    state2 = jax.random.normal(k_state2, (20, state_size), jnp.float32)
    out2 = ppo_actor_forward(state2, params, block_batch=8)   # TB=8, grid=(3,)
    jax.block_until_ready(out2)
    ra2, rb2 = reference_forward(state2, params)
    assert out2.shape == (20, 2 * action_size)
    assert jnp.allclose(out2[:, :action_size], ra2, atol=1e-3, rtol=1e-3), \
        "ragged alpha mismatch"
    assert jnp.allclose(out2[:, action_size:], rb2, atol=1e-3, rtol=1e-3), \
        "ragged beta mismatch"

    print("KERNEL_OK")
</pallas_src>

<mosaic_0001>
module attributes {stable_mosaic.version = 11 : i64} {
  func.func @ppo_actor_kernel(%arg0: i32, %arg1: memref<8x8xf32, #tpu.memory_space<vmem>>, %arg2: memref<8x128xbf16, #tpu.memory_space<vmem>>, %arg3: memref<1x128xf32, #tpu.memory_space<vmem>>, %arg4: memref<128x128xbf16, #tpu.memory_space<vmem>>, %arg5: memref<1x128xf32, #tpu.memory_space<vmem>>, %arg6: memref<128x8xbf16, #tpu.memory_space<vmem>>, %arg7: memref<1x8xf32, #tpu.memory_space<vmem>>, %arg8: memref<8x8xf32, #tpu.memory_space<vmem>>) attributes {dimension_semantics = [#tpu.dimension_semantics<parallel>], iteration_bounds = array<i64: 1>, scalar_prefetch = 0 : i64, scratch_operands = 0 : i64, tpu.core_type = #tpu.core_type<tc>, window_params = [{transform_indices = @transform_0, window_bounds = array<i64: 8, 8>}, {pipeline_mode = #tpu.pipeline_mode<synchronous>, transform_indices = @transform_1, window_bounds = array<i64: 8, 128>}, {pipeline_mode = #tpu.pipeline_mode<synchronous>, transform_indices = @transform_2, window_bounds = array<i64: 1, 128>}, {pipeline_mode = #tpu.pipeline_mode<synchronous>, transform_indices = @transform_3, window_bounds = array<i64: 128, 128>}, {pipeline_mode = #tpu.pipeline_mode<synchronous>, transform_indices = @transform_4, window_bounds = array<i64: 1, 128>}, {pipeline_mode = #tpu.pipeline_mode<synchronous>, transform_indices = @transform_5, window_bounds = array<i64: 128, 8>}, {pipeline_mode = #tpu.pipeline_mode<synchronous>, transform_indices = @transform_6, window_bounds = array<i64: 1, 8>}, {transform_indices = @transform_7, window_bounds = array<i64: 8, 8>}]} {
    %c0 = arith.constant 0 : index
    %c0_0 = arith.constant 0 : index
    %0 = vector.load %arg1[%c0, %c0_0] : memref<8x8xf32, #tpu.memory_space<vmem>>, vector<8x8xf32>
    %1 = arith.truncf %0 : vector<8x8xf32> to vector<8x8xbf16>
    %c0_1 = arith.constant 0 : index
    %c0_2 = arith.constant 0 : index
    %2 = vector.load %arg2[%c0_1, %c0_2] : memref<8x128xbf16, #tpu.memory_space<vmem>>, vector<8x128xbf16>
    %cst = arith.constant dense<0.000000e+00> : vector<8x128xf32>
    %3 = tpu.matmul %1, %2, %cst {dimension_numbers = #tpu.dot_dimension_numbers<[1], [0], [0], [1], [0, 0, 1, 1], [], []>} : vector<8x8xbf16>, vector<8x128xbf16>, vector<8x128xf32> -> vector<8x128xf32>
    %c0_3 = arith.constant 0 : index
    %c0_4 = arith.constant 0 : index
    %4 = vector.load %arg3[%c0_3, %c0_4] : memref<1x128xf32, #tpu.memory_space<vmem>>, vector<1x128xf32>
    %5 = vector.broadcast %4 : vector<1x128xf32> to vector<8x128xf32>
    %6 = arith.addf %3, %5 : vector<8x128xf32>
    %7 = math.tanh %6 : vector<8x128xf32>
    %8 = arith.truncf %7 : vector<8x128xf32> to vector<8x128xbf16>
    %c0_5 = arith.constant 0 : index
    %c0_6 = arith.constant 0 : index
    %9 = vector.load %arg4[%c0_5, %c0_6] : memref<128x128xbf16, #tpu.memory_space<vmem>>, vector<128x128xbf16>
    %cst_7 = arith.constant dense<0.000000e+00> : vector<8x128xf32>
    %10 = tpu.matmul %8, %9, %cst_7 {dimension_numbers = #tpu.dot_dimension_numbers<[1], [0], [0], [1], [0, 0, 1, 1], [], []>} : vector<8x128xbf16>, vector<128x128xbf16>, vector<8x128xf32> -> vector<8x128xf32>
    %c0_8 = arith.constant 0 : index
    %c0_9 = arith.constant 0 : index
    %11 = vector.load %arg5[%c0_8, %c0_9] : memref<1x128xf32, #tpu.memory_space<vmem>>, vector<1x128xf32>
    %12 = vector.broadcast %11 : vector<1x128xf32> to vector<8x128xf32>
    %13 = arith.addf %10, %12 : vector<8x128xf32>
    %14 = math.tanh %13 : vector<8x128xf32>
    %15 = arith.truncf %14 : vector<8x128xf32> to vector<8x128xbf16>
    %c0_10 = arith.constant 0 : index
    %c0_11 = arith.constant 0 : index
    %16 = vector.load %arg6[%c0_10, %c0_11] : memref<128x8xbf16, #tpu.memory_space<vmem>>, vector<128x8xbf16>
    %cst_12 = arith.constant dense<0.000000e+00> : vector<8x8xf32>
    %17 = tpu.matmul %15, %16, %cst_12 {dimension_numbers = #tpu.dot_dimension_numbers<[1], [0], [0], [1], [0, 0, 1, 1], [], []>} : vector<8x128xbf16>, vector<128x8xbf16>, vector<8x8xf32> -> vector<8x8xf32>
    %c0_13 = arith.constant 0 : index
    %c0_14 = arith.constant 0 : index
    %18 = vector.load %arg7[%c0_13, %c0_14] : memref<1x8xf32, #tpu.memory_space<vmem>>, vector<1x8xf32>
    %19 = vector.broadcast %18 : vector<1x8xf32> to vector<8x8xf32>
    %20 = arith.addf %17, %19 : vector<8x8xf32>
    %cst_15 = arith.constant 0.000000e+00 : f32
    %21 = vector.broadcast %cst_15 : f32 to vector<8x8xf32>
    %22 = arith.maximumf %20, %21 : vector<8x8xf32>
    %23 = math.absf %20 : vector<8x8xf32>
    %cst_16 = arith.constant 0.000000e+00 : f32
    %24 = vector.broadcast %cst_16 : f32 to vector<8x8xf32>
    %25 = arith.subf %24, %23 : vector<8x8xf32>
    %26 = math.exp %25 : vector<8x8xf32>
    %cst_17 = arith.constant 1.000000e+00 : f32
    %27 = vector.broadcast %cst_17 : f32 to vector<8x8xf32>
    %28 = arith.addf %27, %26 : vector<8x8xf32>
    %29 = math.log %28 : vector<8x8xf32>
    %30 = arith.addf %22, %29 : vector<8x8xf32>
    %cst_18 = arith.constant 1.000000e+00 : f32
    %31 = vector.broadcast %cst_18 : f32 to vector<8x8xf32>
    %32 = arith.addf %30, %31 : vector<8x8xf32>
    %c0_19 = arith.constant 0 : index
    %c0_20 = arith.constant 0 : index
    %33 = vector.load %arg8[%c0_19, %c0_20] : memref<8x8xf32, #tpu.memory_space<vmem>>, vector<8x8xf32>
    tpu.vector_store %arg8[%c0_19, %c0_20], %32 {strides = array<i32>} : memref<8x8xf32, #tpu.memory_space<vmem>>, vector<8x8xf32>,
    return
  }
  func.func @transform_0(%arg0: i32) -> (i32, i32) {
    %c0_i32 = arith.constant 0 : i32
    %c0_i32_0 = arith.constant 0 : i32
    return %arg0, %c0_i32 : i32, i32
  }
  func.func @transform_1(%arg0: i32) -> (i32, i32) {
    %c0_i32 = arith.constant 0 : i32
    %c0_i32_0 = arith.constant 0 : i32
    %c0_i32_1 = arith.constant 0 : i32
    return %c0_i32, %c0_i32_0 : i32, i32
  }
  func.func @transform_2(%arg0: i32) -> (i32, i32) {
    %c0_i32 = arith.constant 0 : i32
    %c0_i32_0 = arith.constant 0 : i32
    %c0_i32_1 = arith.constant 0 : i32
    return %c0_i32, %c0_i32_0 : i32, i32
  }
  func.func @transform_3(%arg0: i32) -> (i32, i32) {
    %c0_i32 = arith.constant 0 : i32
    %c0_i32_0 = arith.constant 0 : i32
    %c0_i32_1 = arith.constant 0 : i32
    return %c0_i32, %c0_i32_0 : i32, i32
  }
  func.func @transform_4(%arg0: i32) -> (i32, i32) {
    %c0_i32 = arith.constant 0 : i32
    %c0_i32_0 = arith.constant 0 : i32
    %c0_i32_1 = arith.constant 0 : i32
    return %c0_i32, %c0_i32_0 : i32, i32
  }
  func.func @transform_5(%arg0: i32) -> (i32, i32) {
    %c0_i32 = arith.constant 0 : i32
    %c0_i32_0 = arith.constant 0 : i32
    %c0_i32_1 = arith.constant 0 : i32
    return %c0_i32, %c0_i32_0 : i32, i32
  }
  func.func @transform_6(%arg0: i32) -> (i32, i32) {
    %c0_i32 = arith.constant 0 : i32
    %c0_i32_0 = arith.constant 0 : i32
    %c0_i32_1 = arith.constant 0 : i32
    return %c0_i32, %c0_i32_0 : i32, i32
  }
  func.func @transform_7(%arg0: i32) -> (i32, i32) {
    %c0_i32 = arith.constant 0 : i32
    %c0_i32_0 = arith.constant 0 : i32
    return %arg0, %c0_i32 : i32, i32
  }
}

</mosaic_0001>

<llo_original>
// kernel: tpu_custom_call.1
$region0: #{tpu_custom_call.1}
  #allocation0 [shape = 'u32[]', space=smem, size = 0x4, offset = 0x4, fixed_abs, tag = 'smem constant byte address 0x4 - core index']
  #allocation1 [shape = 'u32[144,128]{1,0:T(1,128)}', space=vmem, size = 0x12000, scoped, tag = 'internal scratch']
  %s0 = inlined_call_operand.vmem [shape: f32[8,8], index: 0, kind: input, shape index: {}]
  %s1 = inlined_call_operand.hbm [shape: bf16[8,128], index: 1, kind: input, shape index: {}]
  %s2 = inlined_call_operand.vmem [shape: f32[1,128], index: 2, kind: input, shape index: {}]
  %s3 = inlined_call_operand.vmem [shape: bf16[128,128], index: 3, kind: input, shape index: {}]
  %s4 = inlined_call_operand.hbm [shape: f32[1,128], index: 4, kind: input, shape index: {}]
  %s5 = inlined_call_operand.vmem [shape: bf16[128,8], index: 5, kind: input, shape index: {}]
  %s6 = inlined_call_operand.vmem [shape: f32[1,8], index: 6, kind: input, shape index: {}]
  %s7 = inlined_call_operand.hbm [shape: f32[8,8], index: 7, kind: output, shape index: {}]
  %s8 = sld [smem:[#allocation0]]
  $region46: #{tpu_custom_call.1} parent=0
    _
  %s10 = ssub.s32 1, %s8
  %s11 = scalar_select 0, %s10, %s8
  $region1: #{tpu_custom_call.1} parent=0
    #allocation2 [shape = 'u8[2048]{0}', space=vmem, size = 0x800, scoped, tag = 'input window, operand 1, single buffered']
    #allocation3 [shape = 's32[1]{0}', space=sflag, size = 0x4, scoped, tag = 'scoped memory for tpu_custom_call.1']
    #allocation4 [shape = 's32[1]{0}', space=sflag, size = 0x4, scoped, tag = 'scoped memory for tpu_custom_call.1']
    #allocation5 [shape = 'u8[512]{0}', space=vmem, size = 0x400, scoped, tag = 'input window, operand 4, single buffered']
    #allocation6 [shape = 's32[1]{0}', space=sflag, size = 0x4, scoped, tag = 'scoped memory for tpu_custom_call.1']
    #allocation7 [shape = 'u8[4096]{0}', space=vmem, size = 0x1000, scoped, tag = 'output window, operand 0, single buffered']
    %12 = vsyncpa [#allocation3], 0
    %13 = vsyncpa [#allocation6], 0
    %14 = vsyncpa [#allocation4], 0
    // Predicated region
    $region2: #{tpu_custom_call.1} parent=1 // pred_check
      _
    $region3: #{tpu_custom_call.1} parent=1 // pred_check_branch
      %16 = sbr.rel (0) target = $region5
    $region4: #{tpu_custom_call.1} parent=1 // pred_region
      _
    $region5: #{tpu_custom_call.1} parent=1 // pred_fallthru
      _
    // Predicated region
    $region6: #{tpu_custom_call.1} parent=1 // pred_check
      _
    $region7: #{tpu_custom_call.1} parent=1 // pred_check_branch
      %18 = sbr.rel (0) target = $region9
    $region8: #{tpu_custom_call.1} parent=1 // pred_region
      %s20 = ssub.s32 64, 64
      %21 = vsyncadd [#allocation3], %s20
      %s23 = sshll.u32 [#allocation2], 4
      %s24 = int_to_ptr.vmem [resolvable:$true] %s23
      %26 = dma.hbm_to_vmem [thread:$0]  %s1, 64, %s24, [#allocation3]
    $region9: #{tpu_custom_call.1} parent=1 // pred_fallthru
      _
    // Predicated region
    $region10: #{tpu_custom_call.1} parent=1 // pred_check
      _
    $region11: #{tpu_custom_call.1} parent=1 // pred_check_branch
      %28 = sbr.rel (0) target = $region13
    $region12: #{tpu_custom_call.1} parent=1 // pred_region
      _
    $region13: #{tpu_custom_call.1} parent=1 // pred_fallthru
      _
    // Predicated region
    $region14: #{tpu_custom_call.1} parent=1 // pred_check
      _
    $region15: #{tpu_custom_call.1} parent=1 // pred_check_branch
      %30 = sbr.rel (0) target = $region17
    $region16: #{tpu_custom_call.1} parent=1 // pred_region
      _
    $region17: #{tpu_custom_call.1} parent=1 // pred_fallthru
      _
    // Predicated region
    $region18: #{tpu_custom_call.1} parent=1 // pred_check
      _
    $region19: #{tpu_custom_call.1} parent=1 // pred_check_branch
      %32 = sbr.rel (0) target = $region21
    $region20: #{tpu_custom_call.1} parent=1 // pred_region
      %s34 = ssub.s32 16, 16
      %35 = vsyncadd [#allocation6], %s34
      %s37 = sshll.u32 [#allocation5], 4
      %s38 = int_to_ptr.vmem [resolvable:$true] %s37
      %40 = dma.hbm_to_vmem [thread:$0]  %s4, 16, %s38, [#allocation6]
    $region21: #{tpu_custom_call.1} parent=1 // pred_fallthru
      _
    // Predicated region
    $region22: #{tpu_custom_call.1} parent=1 // pred_check
      _
    $region23: #{tpu_custom_call.1} parent=1 // pred_check_branch
      %42 = sbr.rel (0) target = $region25
    $region24: #{tpu_custom_call.1} parent=1 // pred_region
      _
    $region25: #{tpu_custom_call.1} parent=1 // pred_fallthru
      _
    // Predicated region
    $region26: #{tpu_custom_call.1} parent=1 // pred_check
      _
    $region27: #{tpu_custom_call.1} parent=1 // pred_check_branch
      %44 = sbr.rel (0) target = $region29
    $region28: #{tpu_custom_call.1} parent=1 // pred_region
      _
    $region29: #{tpu_custom_call.1} parent=1 // pred_fallthru
      _
    // Predicated region
    $region30: #{tpu_custom_call.1} parent=1 // pred_check
      _
    $region31: #{tpu_custom_call.1} parent=1 // pred_check_branch
      %46 = sbr.rel (0) target = $region33
    $region32: #{tpu_custom_call.1} parent=1 // pred_region
      %47 = dma.done [#allocation3], 64
    $region33: #{tpu_custom_call.1} parent=1 // pred_fallthru
      _
    // Predicated region
    $region34: #{tpu_custom_call.1} parent=1 // pred_check
      _
    $region35: #{tpu_custom_call.1} parent=1 // pred_check_branch
      %49 = sbr.rel (0) target = $region37
    $region36: #{tpu_custom_call.1} parent=1 // pred_region
      %50 = dma.done [#allocation6], 16
    $region37: #{tpu_custom_call.1} parent=1 // pred_fallthru
      _
    %v52 = vld [vmem:[%s0] sm:$0xff]
    %v53 = vpack.c.bf16 %v52, %v52
    %v54 = vld [vmem:[#allocation2] sm:$0xf]
    %v55 = vld [vmem:[%s2] sm:$0x1]
    %v57 = vlaneseq
    %v58 = vshrl.u32 %v57, 7
    %v59 = vsub.s32 0, %v58
    %v60 = vrot.slane %v55, %v59
    %vm62 = vcmask 64512
    %v64 = vsel %vm62, %v53, 0
    %vm66 = vcmask 1043456
    %v68 = vsel %vm66, %v54, 0
    %70 = vmatprep.subr.bf16.mxu0 0
    %71 = vmatpush1.bf16.msra.mxu0 0
    %72 = vmatprep.subr.bf16.mxu0 0
    %73 = vmatpush1.bf16.msra.mxu0 0
    %74 = vmatprep.subr.bf16.mxu0 0
    %75 = vmatpush1.bf16.msra.mxu0 0
    %76 = vmatprep.subr.bf16.mxu0 0
    %77 = vmatpush1.bf16.msra.mxu0 0
    %78 = vmatprep.subr.bf16.mxu0 0
    %79 = vmatpush1.bf16.msra.mxu0 0
    %80 = vmatprep.subr.bf16.mxu0 0
    %81 = vmatpush1.bf16.msra.mxu0 0
    %82 = vmatprep.subr.bf16.mxu0 0
    %83 = vmatpush1.bf16.msra.mxu0 0
    %84 = vmatprep.subr.bf16.mxu0 0
    %85 = vmatpush1.bf16.msra.mxu0 %v68
    %86 = vmatprep.subr.bf16.mxu0 0
    %87 = vmatpush2.bf16.msra.mxu0 0
    %88 = vmatprep.subr.bf16.mxu0 0
    %89 = vmatpush2.bf16.msra.mxu0 0
    %90 = vmatprep.subr.bf16.mxu0 0
    %91 = vmatpush2.bf16.msra.mxu0 0
    %92 = vmatprep.subr.bf16.mxu0 0
    %93 = vmatpush2.bf16.msra.mxu0 0
    %94 = vmatprep.subr.bf16.mxu0 0
    %95 = vmatpush2.bf16.msra.mxu0 0
    %96 = vmatprep.subr.bf16.mxu0 0
    %97 = vmatpush2.bf16.msra.mxu0 0
    %98 = vmatprep.subr.bf16.mxu0 0
    %99 = vmatpush2.bf16.msra.mxu0 0
    %100 = vmatprep.subr.bf16.mxu0 0
    %101 = vmatpush2.bf16.msra.mxu0 0
    %102 = vmatprep.mubr.bf16.mxu0 0
    %103 = vmatmul.mubr.bf16.gmra.mxu0 %v64
    %v104 = vpop.f32.mrf.mxu0
    %v105 = vadd.f32 %v60, %v104
    %v106 = vpop.f32.mrf.mxu0
    %v107 = vpop.f32.mrf.mxu0
    %v108 = vpop.f32.mrf.mxu0
    %109 = vdwg.mxu0
    %v110 = vtanh.pop %v105
    %v111 = vpack.c.bf16 %v110, %v110
    %v112 = vld [vmem:[%s3] sm:$0xf]
    %v113 = vld [vmem:[%s3 + $0x4] sm:$0xf]
    %v114 = vld [vmem:[%s3 + $0x8] sm:$0xf]
    %v115 = vld [vmem:[%s3 + $0xc] sm:$0xf]
    %v116 = vld [vmem:[%s3 + $0x10] sm:$0xf]
    %v117 = vld [vmem:[%s3 + $0x14] sm:$0xf]
    %v118 = vld [vmem:[%s3 + $0x18] sm:$0xf]
    %v119 = vld [vmem:[%s3 + $0x1c] sm:$0xf]
    %v120 = vld [vmem:[%s3 + $0x20] sm:$0xf]
    %v121 = vld [vmem:[%s3 + $0x24] sm:$0xf]
    %v122 = vld [vmem:[%s3 + $0x28] sm:$0xf]
    %v123 = vld [vmem:[%s3 + $0x2c] sm:$0xf]
    %v124 = vld [vmem:[%s3 + $0x30] sm:$0xf]
    %v125 = vld [vmem:[%s3 + $0x34] sm:$0xf]
    %v126 = vld [vmem:[%s3 + $0x38] sm:$0xf]
    %v127 = vld [vmem:[%s3 + $0x3c] sm:$0xf]
    %v128 = vld [vmem:[#allocation5] sm:$0x1]
    %v130 = vlaneseq
    %v131 = vshrl.u32 %v130, 7
    %v132 = vsub.s32 0, %v131
    %v133 = vrot.slane %v128, %v132
    %v151 = vunpack.c.l.b16 %v112
    %v152 = vunpack.c.l.b16 %v113
    %v153 = vunpack.c.l.b16 %v114
    %v154 = vunpack.c.l.b16 %v115
    %v155 = vunpack.c.l.b16 %v116
    %v156 = vunpack.c.l.b16 %v117
    %v157 = vunpack.c.l.b16 %v118
    %v158 = vunpack.c.l.b16 %v119
    %v159 = vunpack.c.l.b16 %v120
    %v160 = vunpack.c.l.b16 %v121
    %v161 = vunpack.c.l.b16 %v122
    %v162 = vunpack.c.l.b16 %v123
    %v163 = vunpack.c.l.b16 %v124
    %v164 = vunpack.c.l.b16 %v125
    %v165 = vunpack.c.l.b16 %v126
    %v166 = vunpack.c.l.b16 %v127
    %v167 = vpack.c.b16 %v152, %v151
    %v168 = vpack.c.b16 %v154, %v153
    %v169 = vpack.c.b16 %v156, %v155
    %v170 = vpack.c.b16 %v158, %v157
    %v171 = vpack.c.b16 %v160, %v159
    %v172 = vpack.c.b16 %v162, %v161
    %v173 = vpack.c.b16 %v164, %v163
    %v174 = vpack.c.b16 %v166, %v165
    %183 = vmatprep.subr.bf16.mxu0 0
    %184 = vmatpush1.bf16.msra.mxu0 %v174
    %185 = vmatprep.subr.bf16.mxu0 0
    %186 = vmatpush1.bf16.msra.mxu0 %v173
    %187 = vmatprep.subr.bf16.mxu0 0
    %188 = vmatpush1.bf16.msra.mxu0 %v172
    %189 = vmatprep.subr.bf16.mxu0 0
    %190 = vmatpush1.bf16.msra.mxu0 %v171
    %191 = vmatprep.subr.bf16.mxu0 0
    %192 = vmatpush1.bf16.msra.mxu0 %v170
    %193 = vmatprep.subr.bf16.mxu0 0
    %194 = vmatpush1.bf16.msra.mxu0 %v169
    %195 = vmatprep.subr.bf16.mxu0 0
    %196 = vmatpush1.bf16.msra.mxu0 %v168
    %197 = vmatprep.subr.bf16.mxu0 0
    %198 = vmatpush1.bf16.msra.mxu0 %v167
    %199 = vmatprep.subr.bf16.mxu0 0
    %200 = vmatpush2.bf16.msra.mxu0 0
    %201 = vmatprep.subr.bf16.mxu0 0
    %202 = vmatpush2.bf16.msra.mxu0 0
    %203 = vmatprep.subr.bf16.mxu0 0
    %204 = vmatpush2.bf16.msra.mxu0 0
    %205 = vmatprep.subr.bf16.mxu0 0
    %206 = vmatpush2.bf16.msra.mxu0 0
    %207 = vmatprep.subr.bf16.mxu0 0
    %208 = vmatpush2.bf16.msra.mxu0 0
    %209 = vmatprep.subr.bf16.mxu0 0
    %210 = vmatpush2.bf16.msra.mxu0 0
    %211 = vmatprep.subr.bf16.mxu0 0
    %212 = vmatpush2.bf16.msra.mxu0 0
    %213 = vmatprep.subr.bf16.mxu0 0
    %214 = vmatpush2.bf16.msra.mxu0 0
    %215 = vmatprep.mubr.bf16.mxu0 0
    %216 = vmatmul.mubr.bf16.gmra.mxu0 %v111
    %v217 = vpop.f32.mrf.mxu0
    %v218 = vadd.f32 %v133, %v217
    %v219 = vpop.f32.mrf.mxu0
    %v220 = vpop.f32.mrf.mxu0
    %v221 = vpop.f32.mrf.mxu0
    %222 = vdwg.mxu0
    %v223 = vtanh.pop %v218
    %v224 = vpack.c.bf16 %v223, %v223
    %v225 = vld [vmem:[%s5] sm:$0xf]
    %v226 = vld [vmem:[%s5 + $0x4] sm:$0xf]
    %v227 = vld [vmem:[%s5 + $0x8] sm:$0xf]
    %v228 = vld [vmem:[%s5 + $0xc] sm:$0xf]
    %v229 = vld [vmem:[%s5 + $0x10] sm:$0xf]
    %v230 = vld [vmem:[%s5 + $0x14] sm:$0xf]
    %v231 = vld [vmem:[%s5 + $0x18] sm:$0xf]
    %v232 = vld [vmem:[%s5 + $0x1c] sm:$0xf]
    %v233 = vld [vmem:[%s5 + $0x20] sm:$0xf]
    %v234 = vld [vmem:[%s5 + $0x24] sm:$0xf]
    %v235 = vld [vmem:[%s5 + $0x28] sm:$0xf]
    %v236 = vld [vmem:[%s5 + $0x2c] sm:$0xf]
    %v237 = vld [vmem:[%s5 + $0x30] sm:$0xf]
    %v238 = vld [vmem:[%s5 + $0x34] sm:$0xf]
    %v239 = vld [vmem:[%s5 + $0x38] sm:$0xf]
    %v240 = vld [vmem:[%s5 + $0x3c] sm:$0xf]
    %v241 = vld [vmem:[%s6] sm:$0x1]
    %v243 = vlaneseq
    %v244 = vshrl.u32 %v243, 7
    %v245 = vsub.s32 0, %v244
    %v246 = vrot.slane %v241, %v245
    %v264 = vunpack.c.l.b16 %v225
    %v265 = vunpack.c.l.b16 %v226
    %v266 = vunpack.c.l.b16 %v227
    %v267 = vunpack.c.l.b16 %v228
    %v268 = vunpack.c.l.b16 %v229
    %v269 = vunpack.c.l.b16 %v230
    %v270 = vunpack.c.l.b16 %v231
    %v271 = vunpack.c.l.b16 %v232
    %v272 = vunpack.c.l.b16 %v233
    %v273 = vunpack.c.l.b16 %v234
    %v274 = vunpack.c.l.b16 %v235
    %v275 = vunpack.c.l.b16 %v236
    %v276 = vunpack.c.l.b16 %v237
    %v277 = vunpack.c.l.b16 %v238
    %v278 = vunpack.c.l.b16 %v239
    %v279 = vunpack.c.l.b16 %v240
    %v280 = vpack.c.b16 %v265, %v264
    %v281 = vpack.c.b16 %v267, %v266
    %v282 = vpack.c.b16 %v269, %v268
    %v283 = vpack.c.b16 %v271, %v270
    %v284 = vpack.c.b16 %v273, %v272
    %v285 = vpack.c.b16 %v275, %v274
    %v286 = vpack.c.b16 %v277, %v276
    %v287 = vpack.c.b16 %v279, %v278
    %296 = vmatprep.subr.bf16.mxu0 0
    %297 = vmatpush1.bf16.msra.mxu0 %v287
    %298 = vmatprep.subr.bf16.mxu0 0
    %299 = vmatpush1.bf16.msra.mxu0 %v286
    %300 = vmatprep.subr.bf16.mxu0 0
    %301 = vmatpush1.bf16.msra.mxu0 %v285
    %302 = vmatprep.subr.bf16.mxu0 0
    %303 = vmatpush1.bf16.msra.mxu0 %v284
    %304 = vmatprep.subr.bf16.mxu0 0
    %305 = vmatpush1.bf16.msra.mxu0 %v283
    %306 = vmatprep.subr.bf16.mxu0 0
    %307 = vmatpush1.bf16.msra.mxu0 %v282
    %308 = vmatprep.subr.bf16.mxu0 0
    %309 = vmatpush1.bf16.msra.mxu0 %v281
    %310 = vmatprep.subr.bf16.mxu0 0
    %311 = vmatpush1.bf16.msra.mxu0 %v280
    %312 = vmatprep.subr.bf16.mxu0 0
    %313 = vmatpush2.bf16.msra.mxu0 0
    %314 = vmatprep.subr.bf16.mxu0 0
    %315 = vmatpush2.bf16.msra.mxu0 0
    %316 = vmatprep.subr.bf16.mxu0 0
    %317 = vmatpush2.bf16.msra.mxu0 0
    %318 = vmatprep.subr.bf16.mxu0 0
    %319 = vmatpush2.bf16.msra.mxu0 0
    %320 = vmatprep.subr.bf16.mxu0 0
    %321 = vmatpush2.bf16.msra.mxu0 0
    %322 = vmatprep.subr.bf16.mxu0 0
    %323 = vmatpush2.bf16.msra.mxu0 0
    %324 = vmatprep.subr.bf16.mxu0 0
    %325 = vmatpush2.bf16.msra.mxu0 0
    %326 = vmatprep.subr.bf16.mxu0 0
    %327 = vmatpush2.bf16.msra.mxu0 0
    %328 = vmatprep.mubr.bf16.mxu0 0
    %329 = vmatmul.mubr.bf16.gmra.mxu0 %v224
    %v330 = vpop.f32.mrf.mxu0
    %v331 = vadd.f32 %v246, %v330
    %v332 = vpop.f32.mrf.mxu0
    %v333 = vpop.f32.mrf.mxu0
    %v334 = vpop.f32.mrf.mxu0
    %335 = vdwg.mxu0
    %v336 = vmax.f32 %v331, 0.0
    %v337 = vand.u32 2147483647, %v331
    %v338 = vsub.f32 0.0, %v337
    %v339 = vmul.f32 %v338, 1.442695
    %v340 = vpow.pop %v339
    %v341 = vadd.f32 %v340, 1.0
    %v342 = vlog2.pop %v341
    %v343 = vmul.f32 %v342, 0.6931472
    %v344 = vadd.f32 %v336, %v343
    %v345 = vadd.f32 %v344, 1.0
    %346 = vst.msk [vmem:[#allocation7] sm:$0xff] %vm62, %v345
    // Predicated region
    $region38: #{tpu_custom_call.1} parent=1 // pred_check
      _
    $region39: #{tpu_custom_call.1} parent=1 // pred_check_branch
      %348 = sbr.rel (0) target = $region41
    $region40: #{tpu_custom_call.1} parent=1 // pred_region
      %s350 = ssub.s32 128, 128
      %351 = vsyncadd [#allocation4], %s350
      %s353 = sshll.u32 [#allocation7], 4
      %s354 = int_to_ptr.vmem [resolvable:$true] %s353
      %356 = dma.vmem_to_hbm [thread:$0]  %s354, 128, %s7, [#allocation4]
    $region41: #{tpu_custom_call.1} parent=1 // pred_fallthru
      _
    // Predicated region
    $region42: #{tpu_custom_call.1} parent=1 // pred_check
      _
    $region43: #{tpu_custom_call.1} parent=1 // pred_check_branch
      %358 = sbr.rel (0) target = $region45
    $region44: #{tpu_custom_call.1} parent=1 // pred_region
      %359 = dma.done [#allocation4], 128
    $region45: #{tpu_custom_call.1} parent=1 // pred_fallthru
      _
    %360 = vsyncpa [#allocation3], 1
    %361 = vsyncpa [#allocation6], 1
    %362 = vsyncpa [#allocation4], 1

</llo_original>
